<compile_context>
chip_gen: v5e
topology: v5e:2x2
jax: 0.10.0
libtpu: 0.0.40
codegen_flags: <defaults>
</compile_context>

<pallas_src>
import jax
import jax.numpy as jnp
from jax.experimental import pallas as pl
from jax.experimental.pallas import tpu as pltpu

# Smallest normal f32: the TPU VPU flushes subnormals, so torch's 1e-40 would
# degenerate to 0 and log() could emit -inf.  We floor at the smallest normal;
# identical to the reference unless an averaged probability is subnormal.
_CLAMP_MIN = 1.1754944e-38
# Bias for padded (fake) class columns: exp(pad - max) == 0 exactly, so padded
# lanes never perturb the per-model softmax.
_PAD_BIAS = -1e30


def _round_up(x, m):
    return ((x + m - 1) // m) * m


# --------------------------------------------------------------------------
# One-time parameter fusion (hoist this OUT of the per-step forward path).
# --------------------------------------------------------------------------
def fuse_ensemble_params(weights, biases, *, compute_dtype=jnp.bfloat16):
    """[M,H,C] weights / [M,C] biases -> fused [H, M*Cp] / [1, M*Cp], Cp=round_up(C,128)."""
    M, H, C = weights.shape
    assert biases.shape == (M, C) and M >= 1
    Cp = _round_up(C, 128)
    if Cp != C:
        weights = jnp.pad(weights, ((0, 0), (0, 0), (0, Cp - C)))
        biases = jnp.pad(biases, ((0, 0), (0, Cp - C)), constant_values=_PAD_BIAS)
    w_fused = (jnp.transpose(weights, (1, 0, 2))
               .reshape(H, M * Cp).astype(compute_dtype))
    b_fused = biases.reshape(1, M * Cp).astype(jnp.float32)   # bias stays f32
    return w_fused, b_fused, (M, C, Cp)


# --------------------------------------------------------------------------
# Kernels
# --------------------------------------------------------------------------
def _make_resident_kernel(n_models, cp):
    """M > 1, fused W resident in VMEM: per-model sliced dot + softmax, avg, clamp, log."""
    inv_m = 1.0 / float(n_models)          # trace-time Python constant

    def kernel(x_ref, w_ref, b_ref, o_ref):
        x = x_ref[...]
        acc = None
        for m in range(n_models):          # static, 128-aligned lane slices
            wm = w_ref[:, m * cp:(m + 1) * cp]
            bm = b_ref[:, m * cp:(m + 1) * cp]
            lg = jnp.dot(x, wm, preferred_element_type=jnp.float32) + bm
            mx = jnp.max(lg, axis=-1, keepdims=True)
            e = jnp.exp(lg - mx)
            denom = jnp.sum(e, axis=-1, keepdims=True)
            p = e * pl.reciprocal(denom, approx=False)      # exact normalisation
            acc = p if acc is None else acc + p
        avg = acc * jnp.float32(inv_m)
        o_ref[...] = jnp.log(jnp.maximum(avg, jnp.float32(_CLAMP_MIN))).astype(o_ref.dtype)

    return kernel


def _single_model_kernel(x_ref, w_ref, b_ref, o_ref):
    """M == 1 path: the reference returns raw logits (no softmax / log)."""
    lg = jnp.dot(x_ref[...], w_ref[...], preferred_element_type=jnp.float32)
    o_ref[...] = (lg + b_ref[...]).astype(o_ref.dtype)


def _make_streaming_kernel(n_models):
    """M > 1, one (H, Cp) weight slab streamed per grid step; scratch prob accumulator."""
    inv_m = 1.0 / float(n_models)

    def kernel(x_ref, w_ref, b_ref, o_ref, acc_ref):
        m = pl.program_id(1)

        @pl.when(m == 0)
        def _():
            acc_ref[...] = jnp.zeros_like(acc_ref)

        lg = jnp.dot(x_ref[...], w_ref[...], preferred_element_type=jnp.float32) + b_ref[...]
        mx = jnp.max(lg, axis=-1, keepdims=True)
        e = jnp.exp(lg - mx)
        denom = jnp.sum(e, axis=-1, keepdims=True)
        acc_ref[...] += e * pl.reciprocal(denom, approx=False)

        @pl.when(m == n_models - 1)
        def _():
            avg = acc_ref[...] * jnp.float32(inv_m)
            o_ref[...] = jnp.log(jnp.maximum(avg, jnp.float32(_CLAMP_MIN))).astype(o_ref.dtype)

    return kernel


# --------------------------------------------------------------------------
# Forward
# --------------------------------------------------------------------------
def ensemble_forward_fused(x, w_fused, b_fused, meta, *, block_b=None,
                           max_resident_weight_bytes=40 << 20):
    """x: [B, H]; w_fused: [H, M*Cp]; b_fused: [1, M*Cp]  ->  [B, C] f32."""
    M, C, Cp = meta
    B, H = x.shape
    assert w_fused.shape == (H, M * Cp) and b_fused.shape == (1, M * Cp)

    x_c = x.astype(w_fused.dtype)

    # ---- batch tiling ------------------------------------------------------
    if block_b is None:
        block_b = 256 if B >= 512 else 128      # bigger tiles when B is large (v6e/v7x)
    TB = min(block_b, _round_up(B, 8))
    if B > 8 and -(-B // TB) < 2:
        # guarantee >= 2 batch tiles so the "parallel" axis shards across v7x's 2 TCs
        TB = max(8, _round_up(-(-B // 2), 8))
    Bp = _round_up(B, TB)
    if Bp != B:
        x_c = jnp.pad(x_c, ((0, Bp - B), (0, 0)))
    nb = Bp // TB

    w_itemsize = jnp.dtype(w_fused.dtype).itemsize
    x_itemsize = jnp.dtype(x_c.dtype).itemsize
    resident_w_bytes = H * M * Cp * w_itemsize
    use_resident = (M == 1) or (resident_w_bytes <= max_resident_weight_bytes)

    def _build_and_call(single_buffer_w):
        w_mode = pl.Buffered(1) if single_buffer_w else None
        if use_resident:
            kernel = _single_model_kernel if M == 1 else _make_resident_kernel(M, Cp)
            grid = (nb,)
            in_specs = [
                pl.BlockSpec((TB, H), lambda i: (i, 0)),                          # x tile
                pl.BlockSpec((H, M * Cp), lambda i: (0, 0), pipeline_mode=w_mode),  # fused W (resident)
                pl.BlockSpec((1, M * Cp), lambda i: (0, 0), pipeline_mode=w_mode),  # fused bias
            ]
            out_specs = pl.BlockSpec((TB, Cp), lambda i: (i, 0))
            scratch = []
            semantics = ("parallel",)
            w_bufs = 1 if single_buffer_w else 2
            vmem_needed = (2 * TB * H * x_itemsize
                           + w_bufs * (H * M * Cp * w_itemsize + M * Cp * 4)
                           + 2 * TB * Cp * 4)
        else:
            kernel = _make_streaming_kernel(M)
            grid = (nb, M)
            in_specs = [
                pl.BlockSpec((TB, H), lambda i, m: (i, 0)),   # x tile (resident across m)
                pl.BlockSpec((H, Cp), lambda i, m: (0, m)),   # one model's weight slab
                pl.BlockSpec((1, Cp), lambda i, m: (0, m)),   # one model's bias
            ]
            out_specs = pl.BlockSpec((TB, Cp), lambda i, m: (i, 0))
            scratch = [pltpu.VMEM((TB, Cp), jnp.float32)]     # prob accumulator
            semantics = ("parallel", "arbitrary")
            vmem_needed = (2 * TB * H * x_itemsize
                           + 2 * (H * Cp * w_itemsize + Cp * 4)
                           + 2 * TB * Cp * 4
                           + TB * Cp * 4)

        vmem_limit = int(min(max(vmem_needed + (4 << 20), 16 << 20), 100 << 20))

        return pl.pallas_call(
            kernel,
            out_shape=jax.ShapeDtypeStruct((Bp, Cp), jnp.float32),
            grid_spec=pltpu.PrefetchScalarGridSpec(
                num_scalar_prefetch=0,
                grid=grid,
                in_specs=in_specs,
                out_specs=out_specs,
                scratch_shapes=scratch,
            ),
            compiler_params=pltpu.CompilerParams(
                dimension_semantics=semantics,
                vmem_limit_bytes=vmem_limit),
        )(x_c, w_fused, b_fused)

    try:
        out = _build_and_call(single_buffer_w=True)
    except Exception:
        # Fallback if pipeline_mode=pl.Buffered(1) is unsupported in this jax build.
        out = _build_and_call(single_buffer_w=False)

    return out[:B, :C]


def ensemble_forward(x, weights, biases, *, compute_dtype=jnp.bfloat16, **kw):
    """Convenience wrapper.  For repeated calls, hoist `fuse_ensemble_params`
    out of the hot path and call `ensemble_forward_fused` directly."""
    w_fused, b_fused, meta = fuse_ensemble_params(weights, biases,
                                                  compute_dtype=compute_dtype)
    return ensemble_forward_fused(x, w_fused, b_fused, meta, **kw)


# --------------------------------------------------------------------------
# Pure-JAX reference & test
# --------------------------------------------------------------------------
def _reference(x, weights, biases):
    logits = jnp.einsum("bh,mhc->mbc", x, weights) + biases[:, None, :]
    if weights.shape[0] > 1:
        probs = jax.nn.softmax(logits, axis=-1).mean(axis=0)
        return jnp.log(jnp.maximum(probs, _CLAMP_MIN))
    return logits[0]


if __name__ == "__main__":
    key = jax.random.PRNGKey(0)
    B, H, C, M = 16, 32, 100, 3     # C=100 exercises the 128-lane class padding

    kx, kw, kb = jax.random.split(key, 3)
    x = jax.random.normal(kx, (B, H), dtype=jnp.float32)
    weights = jax.random.normal(kw, (M, H, C), dtype=jnp.float32) * 0.1
    biases = jax.random.normal(kb, (M, C), dtype=jnp.float32) * 0.01

    ref = _reference(x, weights, biases)

    # f32 resident-W path (fusion hoisted out of the forward call).
    w_f32, b_f32, meta = fuse_ensemble_params(weights, biases,
                                              compute_dtype=jnp.float32)
    out = jax.block_until_ready(ensemble_forward_fused(x, w_f32, b_f32, meta))
    assert out.shape == (B, C)
    err = float(jnp.max(jnp.abs(out - ref)))
    assert err < 1e-3, f"f32 resident path max abs err {err}"

    # Forced streaming path (one model slab per grid step, scratch accumulator).
    out_s = jax.block_until_ready(
        ensemble_forward_fused(x, w_f32, b_f32, meta, max_resident_weight_bytes=0))
    err_s = float(jnp.max(jnp.abs(out_s - ref)))
    assert out_s.shape == (B, C) and err_s < 1e-3, f"streaming path max abs err {err_s}"

    # Default bf16 weight/activation streaming (halved HBM traffic; looser tol).
    out_bf16 = jax.block_until_ready(ensemble_forward(x, weights, biases))
    err_bf16 = float(jnp.max(jnp.abs(out_bf16 - ref)))
    assert err_bf16 < 2e-1, f"bf16 path max abs err {err_bf16}"

    # Single-model path: reference returns raw logits (no softmax / log).
    out1 = jax.block_until_ready(
        ensemble_forward(x, weights[:1], biases[:1], compute_dtype=jnp.float32))
    ref1 = _reference(x, weights[:1], biases[:1])
    err1 = float(jnp.max(jnp.abs(out1 - ref1)))
    assert out1.shape == (B, C) and err1 < 1e-4, f"single-model err {err1}"

    print("KERNEL_OK")
</pallas_src>

<mosaic_0001>
module attributes {stable_mosaic.version = 11 : i64} {
  func.func @kernel(%arg0: i32, %arg1: memref<8x32xf32, #tpu.memory_space<vmem>>, %arg2: memref<32x384xf32, #tpu.memory_space<vmem>>, %arg3: memref<1x384xf32, #tpu.memory_space<vmem>>, %arg4: memref<8x128xf32, #tpu.memory_space<vmem>>) attributes {dimension_semantics = [#tpu.dimension_semantics<parallel>], iteration_bounds = array<i64: 2>, scalar_prefetch = 0 : i64, scratch_operands = 0 : i64, tpu.core_type = #tpu.core_type<tc>, window_params = [{transform_indices = @transform_0, window_bounds = array<i64: 8, 32>}, {pipeline_mode = #tpu.pipeline_mode<synchronous>, transform_indices = @transform_1, window_bounds = array<i64: 32, 384>}, {pipeline_mode = #tpu.pipeline_mode<synchronous>, transform_indices = @transform_2, window_bounds = array<i64: 1, 384>}, {transform_indices = @transform_3, window_bounds = array<i64: 8, 128>}]} {
    %c0 = arith.constant 0 : index
    %c0_0 = arith.constant 0 : index
    %0 = vector.load %arg1[%c0, %c0_0] : memref<8x32xf32, #tpu.memory_space<vmem>>, vector<8x32xf32>
    %c0_1 = arith.constant 0 : index
    %c0_2 = arith.constant 0 : index
    %1 = vector.load %arg2[%c0_1, %c0_2] : memref<32x384xf32, #tpu.memory_space<vmem>>, vector<32x128xf32>
    %c0_3 = arith.constant 0 : index
    %c0_4 = arith.constant 0 : index
    %2 = vector.load %arg3[%c0_3, %c0_4] : memref<1x384xf32, #tpu.memory_space<vmem>>, vector<1x128xf32>
    %cst = arith.constant dense<0.000000e+00> : vector<8x128xf32>
    %3 = tpu.matmul %0, %1, %cst {dimension_numbers = #tpu.dot_dimension_numbers<[1], [0], [0], [1], [0, 0, 1, 1], [], []>} : vector<8x32xf32>, vector<32x128xf32>, vector<8x128xf32> -> vector<8x128xf32>
    %4 = vector.broadcast %2 : vector<1x128xf32> to vector<8x128xf32>
    %5 = arith.addf %3, %4 : vector<8x128xf32>
    %cst_5 = arith.constant dense<0xFF800000> : vector<8xf32>
    %6 = vector.multi_reduction <maximumf>, %5, %cst_5 [1] : vector<8x128xf32> to vector<8xf32>
    %7 = vector.shape_cast %6 : vector<8xf32> to vector<8x1xf32>
    %8 = vector.broadcast %7 : vector<8x1xf32> to vector<8x128xf32>
    %9 = arith.subf %5, %8 : vector<8x128xf32>
    %10 = math.exp %9 : vector<8x128xf32>
    %cst_6 = arith.constant dense<0.000000e+00> : vector<8xf32>
    %11 = vector.multi_reduction <add>, %10, %cst_6 [1] : vector<8x128xf32> to vector<8xf32>
    %12 = vector.shape_cast %11 : vector<8xf32> to vector<8x1xf32>
    %13 = tpu.reciprocal %12 : vector<8x1xf32> -> vector<8x1xf32>
    %14 = vector.broadcast %13 : vector<8x1xf32> to vector<8x128xf32>
    %15 = arith.mulf %10, %14 : vector<8x128xf32>
    %c0_7 = arith.constant 0 : index
    %c128 = arith.constant 128 : index
    %16 = vector.load %arg2[%c0_7, %c128] : memref<32x384xf32, #tpu.memory_space<vmem>>, vector<32x128xf32>
    %c0_8 = arith.constant 0 : index
    %c128_9 = arith.constant 128 : index
    %17 = vector.load %arg3[%c0_8, %c128_9] : memref<1x384xf32, #tpu.memory_space<vmem>>, vector<1x128xf32>
    %cst_10 = arith.constant dense<0.000000e+00> : vector<8x128xf32>
    %18 = tpu.matmul %0, %16, %cst_10 {dimension_numbers = #tpu.dot_dimension_numbers<[1], [0], [0], [1], [0, 0, 1, 1], [], []>} : vector<8x32xf32>, vector<32x128xf32>, vector<8x128xf32> -> vector<8x128xf32>
    %19 = vector.broadcast %17 : vector<1x128xf32> to vector<8x128xf32>
    %20 = arith.addf %18, %19 : vector<8x128xf32>
    %cst_11 = arith.constant dense<0xFF800000> : vector<8xf32>
    %21 = vector.multi_reduction <maximumf>, %20, %cst_11 [1] : vector<8x128xf32> to vector<8xf32>
    %22 = vector.shape_cast %21 : vector<8xf32> to vector<8x1xf32>
    %23 = vector.broadcast %22 : vector<8x1xf32> to vector<8x128xf32>
    %24 = arith.subf %20, %23 : vector<8x128xf32>
    %25 = math.exp %24 : vector<8x128xf32>
    %cst_12 = arith.constant dense<0.000000e+00> : vector<8xf32>
    %26 = vector.multi_reduction <add>, %25, %cst_12 [1] : vector<8x128xf32> to vector<8xf32>
    %27 = vector.shape_cast %26 : vector<8xf32> to vector<8x1xf32>
    %28 = tpu.reciprocal %27 : vector<8x1xf32> -> vector<8x1xf32>
    %29 = vector.broadcast %28 : vector<8x1xf32> to vector<8x128xf32>
    %30 = arith.mulf %25, %29 : vector<8x128xf32>
    %31 = arith.addf %15, %30 : vector<8x128xf32>
    %c0_13 = arith.constant 0 : index
    %c256 = arith.constant 256 : index
    %32 = vector.load %arg2[%c0_13, %c256] : memref<32x384xf32, #tpu.memory_space<vmem>>, vector<32x128xf32>
    %c0_14 = arith.constant 0 : index
    %c256_15 = arith.constant 256 : index
    %33 = vector.load %arg3[%c0_14, %c256_15] : memref<1x384xf32, #tpu.memory_space<vmem>>, vector<1x128xf32>
    %cst_16 = arith.constant dense<0.000000e+00> : vector<8x128xf32>
    %34 = tpu.matmul %0, %32, %cst_16 {dimension_numbers = #tpu.dot_dimension_numbers<[1], [0], [0], [1], [0, 0, 1, 1], [], []>} : vector<8x32xf32>, vector<32x128xf32>, vector<8x128xf32> -> vector<8x128xf32>
    %35 = vector.broadcast %33 : vector<1x128xf32> to vector<8x128xf32>
    %36 = arith.addf %34, %35 : vector<8x128xf32>
    %cst_17 = arith.constant dense<0xFF800000> : vector<8xf32>
    %37 = vector.multi_reduction <maximumf>, %36, %cst_17 [1] : vector<8x128xf32> to vector<8xf32>
    %38 = vector.shape_cast %37 : vector<8xf32> to vector<8x1xf32>
    %39 = vector.broadcast %38 : vector<8x1xf32> to vector<8x128xf32>
    %40 = arith.subf %36, %39 : vector<8x128xf32>
    %41 = math.exp %40 : vector<8x128xf32>
    %cst_18 = arith.constant dense<0.000000e+00> : vector<8xf32>
    %42 = vector.multi_reduction <add>, %41, %cst_18 [1] : vector<8x128xf32> to vector<8xf32>
    %43 = vector.shape_cast %42 : vector<8xf32> to vector<8x1xf32>
    %44 = tpu.reciprocal %43 : vector<8x1xf32> -> vector<8x1xf32>
    %45 = vector.broadcast %44 : vector<8x1xf32> to vector<8x128xf32>
    %46 = arith.mulf %41, %45 : vector<8x128xf32>
    %47 = arith.addf %31, %46 : vector<8x128xf32>
    %cst_19 = arith.constant 0.333333343 : f32
    %48 = vector.broadcast %cst_19 : f32 to vector<8x128xf32>
    %49 = arith.mulf %47, %48 : vector<8x128xf32>
    %cst_20 = arith.constant 1.17549435E-38 : f32
    %50 = vector.broadcast %cst_20 : f32 to vector<8x128xf32>
    %51 = arith.maximumf %49, %50 : vector<8x128xf32>
    %52 = math.log %51 : vector<8x128xf32>
    %c0_21 = arith.constant 0 : index
    %c0_22 = arith.constant 0 : index
    %53 = vector.load %arg4[%c0_21, %c0_22] : memref<8x128xf32, #tpu.memory_space<vmem>>, vector<8x128xf32>
    tpu.vector_store %arg4[%c0_21, %c0_22], %52 {strides = array<i32>} : memref<8x128xf32, #tpu.memory_space<vmem>>, vector<8x128xf32>,
    return
  }
  func.func @transform_0(%arg0: i32) -> (i32, i32) {
    %c0_i32 = arith.constant 0 : i32
    %c0_i32_0 = arith.constant 0 : i32
    return %arg0, %c0_i32 : i32, i32
  }
  func.func @transform_1(%arg0: i32) -> (i32, i32) {
    %c0_i32 = arith.constant 0 : i32
    %c0_i32_0 = arith.constant 0 : i32
    %c0_i32_1 = arith.constant 0 : i32
    return %c0_i32, %c0_i32_0 : i32, i32
  }
  func.func @transform_2(%arg0: i32) -> (i32, i32) {
    %c0_i32 = arith.constant 0 : i32
    %c0_i32_0 = arith.constant 0 : i32
    %c0_i32_1 = arith.constant 0 : i32
    return %c0_i32, %c0_i32_0 : i32, i32
  }
  func.func @transform_3(%arg0: i32) -> (i32, i32) {
    %c0_i32 = arith.constant 0 : i32
    %c0_i32_0 = arith.constant 0 : i32
    return %arg0, %c0_i32 : i32, i32
  }
}

module attributes {stable_mosaic.version = 11 : i64} {
  func.func @kernel(%arg0: i32, %arg1: memref<8x32xf32, #tpu.memory_space<vmem>>, %arg2: memref<32x384xf32, #tpu.memory_space<vmem>>, %arg3: memref<1x384xf32, #tpu.memory_space<vmem>>, %arg4: memref<8x128xf32, #tpu.memory_space<vmem>>) attributes {dimension_semantics = [#tpu.dimension_semantics<parallel>], iteration_bounds = array<i64: 2>, scalar_prefetch = 0 : i64, scratch_operands = 0 : i64, tpu.core_type = #tpu.core_type<tc>, window_params = [{transform_indices = @transform_0, window_bounds = array<i64: 8, 32>}, {pipeline_mode = #tpu.pipeline_mode<synchronous>, transform_indices = @transform_1, window_bounds = array<i64: 32, 384>}, {pipeline_mode = #tpu.pipeline_mode<synchronous>, transform_indices = @transform_2, window_bounds = array<i64: 1, 384>}, {transform_indices = @transform_3, window_bounds = array<i64: 8, 128>}]} {
    %c0 = arith.constant 0 : index
    %c0_0 = arith.constant 0 : index
    %0 = vector.load %arg1[%c0, %c0_0] : memref<8x32xf32, #tpu.memory_space<vmem>>, vector<8x32xf32>
    %c0_1 = arith.constant 0 : index
    %c0_2 = arith.constant 0 : index
    %1 = vector.load %arg2[%c0_1, %c0_2] : memref<32x384xf32, #tpu.memory_space<vmem>>, vector<32x128xf32>
    %c0_3 = arith.constant 0 : index
    %c0_4 = arith.constant 0 : index
    %2 = vector.load %arg3[%c0_3, %c0_4] : memref<1x384xf32, #tpu.memory_space<vmem>>, vector<1x128xf32>
    %cst = arith.constant dense<0.000000e+00> : vector<8x128xf32>
    %3 = tpu.matmul %0, %1, %cst {dimension_numbers = #tpu.dot_dimension_numbers<[1], [0], [0], [1], [0, 0, 1, 1], [], []>} : vector<8x32xf32>, vector<32x128xf32>, vector<8x128xf32> -> vector<8x128xf32>
    %4 = vector.broadcast %2 : vector<1x128xf32> to vector<8x128xf32>
    %5 = arith.addf %3, %4 : vector<8x128xf32>
    %cst_5 = arith.constant dense<0xFF800000> : vector<8xf32>
    %6 = vector.multi_reduction <maximumf>, %5, %cst_5 [1] : vector<8x128xf32> to vector<8xf32>
    %7 = vector.shape_cast %6 : vector<8xf32> to vector<8x1xf32>
    %8 = vector.broadcast %7 : vector<8x1xf32> to vector<8x128xf32>
    %9 = arith.subf %5, %8 : vector<8x128xf32>
    %10 = math.exp %9 : vector<8x128xf32>
    %cst_6 = arith.constant dense<0.000000e+00> : vector<8xf32>
    %11 = vector.multi_reduction <add>, %10, %cst_6 [1] : vector<8x128xf32> to vector<8xf32>
    %12 = vector.shape_cast %11 : vector<8xf32> to vector<8x1xf32>
    %13 = tpu.reciprocal %12 : vector<8x1xf32> -> vector<8x1xf32>
    %14 = vector.broadcast %13 : vector<8x1xf32> to vector<8x128xf32>
    %15 = arith.mulf %10, %14 : vector<8x128xf32>
    %c0_7 = arith.constant 0 : index
    %c128 = arith.constant 128 : index
    %16 = vector.load %arg2[%c0_7, %c128] : memref<32x384xf32, #tpu.memory_space<vmem>>, vector<32x128xf32>
    %c0_8 = arith.constant 0 : index
    %c128_9 = arith.constant 128 : index
    %17 = vector.load %arg3[%c0_8, %c128_9] : memref<1x384xf32, #tpu.memory_space<vmem>>, vector<1x128xf32>
    %cst_10 = arith.constant dense<0.000000e+00> : vector<8x128xf32>
    %18 = tpu.matmul %0, %16, %cst_10 {dimension_numbers = #tpu.dot_dimension_numbers<[1], [0], [0], [1], [0, 0, 1, 1], [], []>} : vector<8x32xf32>, vector<32x128xf32>, vector<8x128xf32> -> vector<8x128xf32>
    %19 = vector.broadcast %17 : vector<1x128xf32> to vector<8x128xf32>
    %20 = arith.addf %18, %19 : vector<8x128xf32>
    %cst_11 = arith.constant dense<0xFF800000> : vector<8xf32>
    %21 = vector.multi_reduction <maximumf>, %20, %cst_11 [1] : vector<8x128xf32> to vector<8xf32>
    %22 = vector.shape_cast %21 : vector<8xf32> to vector<8x1xf32>
    %23 = vector.broadcast %22 : vector<8x1xf32> to vector<8x128xf32>
    %24 = arith.subf %20, %23 : vector<8x128xf32>
    %25 = math.exp %24 : vector<8x128xf32>
    %cst_12 = arith.constant dense<0.000000e+00> : vector<8xf32>
    %26 = vector.multi_reduction <add>, %25, %cst_12 [1] : vector<8x128xf32> to vector<8xf32>
    %27 = vector.shape_cast %26 : vector<8xf32> to vector<8x1xf32>
    %28 = tpu.reciprocal %27 : vector<8x1xf32> -> vector<8x1xf32>
    %29 = vector.broadcast %28 : vector<8x1xf32> to vector<8x128xf32>
    %30 = arith.mulf %25, %29 : vector<8x128xf32>
    %31 = arith.addf %15, %30 : vector<8x128xf32>
    %c0_13 = arith.constant 0 : index
    %c256 = arith.constant 256 : index
    %32 = vector.load %arg2[%c0_13, %c256] : memref<32x384xf32, #tpu.memory_space<vmem>>, vector<32x128xf32>
    %c0_14 = arith.constant 0 : index
    %c256_15 = arith.constant 256 : index
    %33 = vector.load %arg3[%c0_14, %c256_15] : memref<1x384xf32, #tpu.memory_space<vmem>>, vector<1x128xf32>
    %cst_16 = arith.constant dense<0.000000e+00> : vector<8x128xf32>
    %34 = tpu.matmul %0, %32, %cst_16 {dimension_numbers = #tpu.dot_dimension_numbers<[1], [0], [0], [1], [0, 0, 1, 1], [], []>} : vector<8x32xf32>, vector<32x128xf32>, vector<8x128xf32> -> vector<8x128xf32>
    %35 = vector.broadcast %33 : vector<1x128xf32> to vector<8x128xf32>
    %36 = arith.addf %34, %35 : vector<8x128xf32>
    %cst_17 = arith.constant dense<0xFF800000> : vector<8xf32>
    %37 = vector.multi_reduction <maximumf>, %36, %cst_17 [1] : vector<8x128xf32> to vector<8xf32>
    %38 = vector.shape_cast %37 : vector<8xf32> to vector<8x1xf32>
    %39 = vector.broadcast %38 : vector<8x1xf32> to vector<8x128xf32>
    %40 = arith.subf %36, %39 : vector<8x128xf32>
    %41 = math.exp %40 : vector<8x128xf32>
    %cst_18 = arith.constant dense<0.000000e+00> : vector<8xf32>
    %42 = vector.multi_reduction <add>, %41, %cst_18 [1] : vector<8x128xf32> to vector<8xf32>
    %43 = vector.shape_cast %42 : vector<8xf32> to vector<8x1xf32>
    %44 = tpu.reciprocal %43 : vector<8x1xf32> -> vector<8x1xf32>
    %45 = vector.broadcast %44 : vector<8x1xf32> to vector<8x128xf32>
    %46 = arith.mulf %41, %45 : vector<8x128xf32>
    %47 = arith.addf %31, %46 : vector<8x128xf32>
    %cst_19 = arith.constant 0.333333343 : f32
    %48 = vector.broadcast %cst_19 : f32 to vector<8x128xf32>
    %49 = arith.mulf %47, %48 : vector<8x128xf32>
    %cst_20 = arith.constant 1.17549435E-38 : f32
    %50 = vector.broadcast %cst_20 : f32 to vector<8x128xf32>
    %51 = arith.maximumf %49, %50 : vector<8x128xf32>
    %52 = math.log %51 : vector<8x128xf32>
    %c0_21 = arith.constant 0 : index
    %c0_22 = arith.constant 0 : index
    %53 = vector.load %arg4[%c0_21, %c0_22] : memref<8x128xf32, #tpu.memory_space<vmem>>, vector<8x128xf32>
    tpu.vector_store %arg4[%c0_21, %c0_22], %52 {strides = array<i32>} : memref<8x128xf32, #tpu.memory_space<vmem>>, vector<8x128xf32>,
    return
  }
  func.func @transform_0(%arg0: i32) -> (i32, i32) {
    %c0_i32 = arith.constant 0 : i32
    %c0_i32_0 = arith.constant 0 : i32
    return %arg0, %c0_i32 : i32, i32
  }
  func.func @transform_1(%arg0: i32) -> (i32, i32) {
    %c0_i32 = arith.constant 0 : i32
    %c0_i32_0 = arith.constant 0 : i32
    %c0_i32_1 = arith.constant 0 : i32
    return %c0_i32, %c0_i32_0 : i32, i32
  }
  func.func @transform_2(%arg0: i32) -> (i32, i32) {
    %c0_i32 = arith.constant 0 : i32
    %c0_i32_0 = arith.constant 0 : i32
    %c0_i32_1 = arith.constant 0 : i32
    return %c0_i32, %c0_i32_0 : i32, i32
  }
  func.func @transform_3(%arg0: i32) -> (i32, i32) {
    %c0_i32 = arith.constant 0 : i32
    %c0_i32_0 = arith.constant 0 : i32
    return %arg0, %c0_i32 : i32, i32
  }
}

</mosaic_0001>

<llo_original>
// kernel: tpu_custom_call.1
$region0: #{tpu_custom_call.1}
  #allocation0 [shape = 'u32[]', space=smem, size = 0x4, offset = 0x4, fixed_abs, tag = 'smem constant byte address 0x4 - core index']
  #allocation1 [shape = 'u32[72,128]{1,0:T(1,128)}', space=vmem, size = 0x9000, scoped, tag = 'internal scratch']
  %s0 = inlined_call_operand.hbm [shape: f32[16,32], index: 0, kind: input, shape index: {}]
  %s1 = inlined_call_operand.hbm [shape: f32[32,384], index: 1, kind: input, shape index: {}]
  %s2 = inlined_call_operand.hbm [shape: f32[1,384], index: 2, kind: input, shape index: {}]
  %s3 = inlined_call_operand.hbm [shape: f32[16,128], index: 3, kind: output, shape index: {}]
  %s4 = sld [smem:[#allocation0]]
  $region57: #{tpu_custom_call.1} parent=0
    _
  %s6 = ssub.s32 1, %s4
  %s7 = scalar_select 0, %s6, %s4
  $region1: #{tpu_custom_call.1} parent=0
    #allocation2 [shape = 'u8[8192]{0}', space=vmem, size = 0x2000, scoped, tag = 'input window, operand 0']
    #allocation3 [shape = 's32[2]{0}', space=sflag, size = 0x8, scoped, tag = 'scoped memory for tpu_custom_call.1']
    #allocation4 [shape = 's32[2]{0}', space=sflag, size = 0x8, scoped, tag = 'scoped memory for tpu_custom_call.1']
    #allocation5 [shape = 'u8[49152]{0}', space=vmem, size = 0xc000, scoped, tag = 'input window, operand 1, single buffered']
    #allocation6 [shape = 's32[1]{0}', space=sflag, size = 0x4, scoped, tag = 'scoped memory for tpu_custom_call.1']
    #allocation7 [shape = 'u8[1536]{0}', space=vmem, size = 0x800, scoped, tag = 'input window, operand 2, single buffered']
    #allocation8 [shape = 'u8[8192]{0}', space=vmem, size = 0x2000, scoped, tag = 'output window, operand 0']
    %8 = vsyncpa [#allocation3], 0
    %s9 = scalar_lea.sflag [#allocation3], 1
    %10 = vsyncpa %s9, 0
    %11 = vsyncpa [#allocation6], 0
    %12 = vsyncpa [#allocation4], 0
    %s13 = scalar_lea.sflag [#allocation4], 1
    %14 = vsyncpa %s13, 0
    loop: start=0, step=1, limit=4
    $region2: #{tpu_custom_call.1} parent=1 // loop_pre_header
      _
    $region3: #{tpu_custom_call.1} parent=1 // loop_header
      %s16 = sphi 0, %s20
      %p17 = scmp.ge.s32.totalorder %s16, 4
      %s26 = sphi 0, %s28
      %s29 = sphi 0, %s26
      %s30 = sphi 0, %s29
      %s46 = sphi 0, %s30
      %s50 = sphi 0, %s50
      %s52 = sphi 0, %s50
      %s53 = sphi 0, %s52
      %s67 = sphi 0, %s53
      %s71 = sphi 0, %s71
      %s73 = sphi 0, %s71
      %s74 = sphi 0, %s73
      %s88 = sphi 0, %s74
      %s94 = sphi 0, %s96
      %s97 = sphi 0, %s94
      %s98 = sphi 0, %s97
      %s114 = sphi 0, %s98
    $region4: #{tpu_custom_call.1} parent=1 // loop_header_branch
      %19 = sbr.rel (%p17) target = $region8
    $region5: #{tpu_custom_call.1} parent=1 // loop_body
      %s21 = ssub.s32 %s16, 1
      %s22 = ssub.s32 %s16, 2
      %s23 = sadd.s32 %s16, 1
      %s24 = ssub.s32 %s16, %s23
      %p25 = scmp.eq.s32.totalorder %s24, 0
      %s27 = sadd.s32 %s26, 1
      %s28 = scalar_select %p25, %s26, %s27
      %p31 = pneg %p25
      %p32 = scmp.eq.s32.totalorder %s16, 1
      %p33 = por %p31, %p32
      %p34 = scmp.ne.s32.totalorder %s26, %s29
      %p35 = scmp.eq.s32.totalorder %s16, 0
      %p36 = por %p34, %p35
      %p37 = scmp.ne.s32.totalorder %s26, %s29
      %p38 = scmp.eq.s32.totalorder %s21, 1
      %p39 = por %p37, %p38
      %p40 = scmp.ne.s32.totalorder %s29, %s30
      %p41 = scmp.eq.s32.totalorder %s21, 0
      %p42 = por %p40, %p41
      %p43 = scmp.ne.s32.totalorder %s29, %s30
      %p44 = scmp.eq.s32.totalorder %s22, 1
      %p45 = por %p43, %p44
      %p47 = scmp.ne.s32.totalorder %s30, %s46
      %p48 = scmp.eq.s32.totalorder %s22, 0
      %p49 = por %p47, %p48
      %s51 = sadd.s32 %s50, 1
      %p54 = scmp.eq.s32.totalorder %s16, 1
      %p55 = scmp.ne.s32.totalorder %s50, %s52
      %p56 = scmp.eq.s32.totalorder %s16, 0
      %p57 = por %p55, %p56
      %p58 = scmp.ne.s32.totalorder %s50, %s52
      %p59 = scmp.eq.s32.totalorder %s21, 1
      %p60 = por %p58, %p59
      %p61 = scmp.ne.s32.totalorder %s52, %s53
      %p62 = scmp.eq.s32.totalorder %s21, 0
      %p63 = por %p61, %p62
      %p64 = scmp.ne.s32.totalorder %s52, %s53
      %p65 = scmp.eq.s32.totalorder %s22, 1
      %p66 = por %p64, %p65
      %p68 = scmp.ne.s32.totalorder %s53, %s67
      %p69 = scmp.eq.s32.totalorder %s22, 0
      %p70 = por %p68, %p69
      %s72 = sadd.s32 %s71, 1
      %p75 = scmp.eq.s32.totalorder %s16, 1
      %p76 = scmp.ne.s32.totalorder %s71, %s73
      %p77 = scmp.eq.s32.totalorder %s16, 0
      %p78 = por %p76, %p77
      %p79 = scmp.ne.s32.totalorder %s71, %s73
      %p80 = scmp.eq.s32.totalorder %s21, 1
      %p81 = por %p79, %p80
      %p82 = scmp.ne.s32.totalorder %s73, %s74
      %p83 = scmp.eq.s32.totalorder %s21, 0
      %p84 = por %p82, %p83
      %p85 = scmp.ne.s32.totalorder %s73, %s74
      %p86 = scmp.eq.s32.totalorder %s22, 1
      %p87 = por %p85, %p86
      %p89 = scmp.ne.s32.totalorder %s74, %s88
      %p90 = scmp.eq.s32.totalorder %s22, 0
      %p91 = por %p89, %p90
      %s92 = ssub.s32 %s16, %s23
      %p93 = scmp.eq.s32.totalorder %s92, 0
      %s95 = sadd.s32 %s94, 1
      %s96 = scalar_select %p93, %s94, %s95
      %p99 = pneg %p93
      %p100 = scmp.eq.s32.totalorder %s16, 1
      %p101 = por %p99, %p100
      %p102 = scmp.ne.s32.totalorder %s94, %s97
      %p103 = scmp.eq.s32.totalorder %s16, 0
      %p104 = por %p102, %p103
      %p105 = scmp.ne.s32.totalorder %s94, %s97
      %p106 = scmp.eq.s32.totalorder %s21, 1
      %p107 = por %p105, %p106
      %p108 = scmp.ne.s32.totalorder %s97, %s98
      %p109 = scmp.eq.s32.totalorder %s21, 0
      %p110 = por %p108, %p109
      %p111 = scmp.ne.s32.totalorder %s97, %s98
      %p112 = scmp.eq.s32.totalorder %s22, 1
      %p113 = por %p111, %p112
      %p115 = scmp.ne.s32.totalorder %s98, %s114
      %p116 = scmp.eq.s32.totalorder %s22, 0
      %p117 = por %p115, %p116
      %p118 = scmp.le.s32.totalorder 1, %s16
      %p119 = scmp.lt.s32.totalorder %s16, 3
      %p120 = pnand %p118, %p119
      %p121 = pneg %p120
      // Predicated region
      $region9: #{tpu_custom_call.1} parent=5 // pred_check
        _
      $region10: #{tpu_custom_call.1} parent=5 // pred_check_branch
        %123 = sbr.rel (%p120) target = $region12
      $region11: #{tpu_custom_call.1} parent=5 // pred_region
        %s124 = ssub.s32 %s16, 1
        // Predicated region
        $region13: #{tpu_custom_call.1} parent=11 // pred_check
          %p125 = pneg %p63
        $region14: #{tpu_custom_call.1} parent=11 // pred_check_branch
          %127 = sbr.rel (%p125) target = $region16
        $region15: #{tpu_custom_call.1} parent=11 // pred_region
          %129 = vsyncadd [#allocation6], 0
          %s130 = sshll.u32 %s1, 4
          %s131 = int_to_ptr.hbm [resolvable:$true] %s130
          %s132 = sshll.u32 [#allocation5], 4
          %s133 = int_to_ptr.vmem [resolvable:$true] %s132
          %138 = dma.hbm_to_vmem [thread:$0]  %s131, 1536, %s133, [#allocation6], 384, 384, 24
        $region16: #{tpu_custom_call.1} parent=11 // pred_fallthru
          _
        // Predicated region
        $region17: #{tpu_custom_call.1} parent=11 // pred_check
          %p139 = pneg %p84
        $region18: #{tpu_custom_call.1} parent=11 // pred_check_branch
          %141 = sbr.rel (%p139) target = $region20
        $region19: #{tpu_custom_call.1} parent=11 // pred_region
          %143 = vsyncadd [#allocation6], 0
          %s145 = sshll.u32 %s2, 4
          %s146 = int_to_ptr.hbm [resolvable:$true] %s145
          %s147 = sshll.u32 [#allocation7], 4
          %s148 = int_to_ptr.vmem [resolvable:$true] %s147
          %150 = dma.hbm_to_vmem [thread:$0]  %s146, 48, %s148, [#allocation6]
        $region20: #{tpu_custom_call.1} parent=11 // pred_fallthru
          _
      $region12: #{tpu_custom_call.1} parent=5 // pred_fallthru
        _
      %p151 = scmp.lt.s32.totalorder %s16, 2
      // Predicated region
      $region21: #{tpu_custom_call.1} parent=5 // pred_check
        %p152 = pneg %p151
      $region22: #{tpu_custom_call.1} parent=5 // pred_check_branch
        %154 = sbr.rel (%p152) target = $region24
      $region23: #{tpu_custom_call.1} parent=5 // pred_region
        // Predicated region
        $region25: #{tpu_custom_call.1} parent=23 // pred_check
          %p155 = pneg %p36
        $region26: #{tpu_custom_call.1} parent=23 // pred_check_branch
          %157 = sbr.rel (%p155) target = $region28
        $region27: #{tpu_custom_call.1} parent=23 // pred_region
          %s158 = sand.u32 %s26, 1
          %s159 = scalar_lea.sflag [#allocation3], %s158
          %s160 = sand.u32 %s26, 1
          %s161 = smul.addr %s160, 8
          %s162 = scalar_lea.vmem [#allocation2], %s161
          %164 = vsyncadd %s159, 0
          %s165 = smul.addr %s16, 8
          %s166 = scalar_lea.hbm %s0, %s165
          %s168 = sshll.u32 %s166, 4
          %s169 = int_to_ptr.hbm [resolvable:$true] %s168
          %s170 = sshll.u32 %s162, 4
          %s171 = int_to_ptr.vmem [resolvable:$true] %s170
          %173 = dma.hbm_to_vmem [thread:$0]  %s169, 128, %s171, %s159
        $region28: #{tpu_custom_call.1} parent=23 // pred_fallthru
          _
      $region24: #{tpu_custom_call.1} parent=5 // pred_fallthru
        _
      %p174 = scmp.le.s32.totalorder 1, %s16
      %p175 = scmp.lt.s32.totalorder %s16, 3
      %p176 = pnand %p174, %p175
      %p177 = pneg %p176
      // Predicated region
      $region29: #{tpu_custom_call.1} parent=5 // pred_check
        _
      $region30: #{tpu_custom_call.1} parent=5 // pred_check_branch
        %179 = sbr.rel (%p176) target = $region32
      $region31: #{tpu_custom_call.1} parent=5 // pred_region
        %s180 = ssub.s32 %s16, 1
        %s181 = sand.u32 %s29, 1
        %s182 = scalar_lea.sflag [#allocation3], %s181
        %s183 = sand.u32 %s29, 1
        %s184 = smul.addr %s183, 8
        %s185 = scalar_lea.vmem [#allocation2], %s184
        // Predicated region
        $region33: #{tpu_custom_call.1} parent=31 // pred_check
          %p186 = pneg %p42
        $region34: #{tpu_custom_call.1} parent=31 // pred_check_branch
          %188 = sbr.rel (%p186) target = $region36
        $region35: #{tpu_custom_call.1} parent=31 // pred_region
          %190 = dma.done %s182, 128
        $region36: #{tpu_custom_call.1} parent=31 // pred_fallthru
          _
        // Predicated region
        $region37: #{tpu_custom_call.1} parent=31 // pred_check
          %p191 = pneg %p63
        $region38: #{tpu_custom_call.1} parent=31 // pred_check_branch
          %193 = sbr.rel (%p191) target = $region40
        $region39: #{tpu_custom_call.1} parent=31 // pred_region
          %195 = dma.done [#allocation6], 1536
        $region40: #{tpu_custom_call.1} parent=31 // pred_fallthru
          _
        // Predicated region
        $region41: #{tpu_custom_call.1} parent=31 // pred_check
          %p196 = pneg %p84
        $region42: #{tpu_custom_call.1} parent=31 // pred_check_branch
          %198 = sbr.rel (%p196) target = $region44
        $region43: #{tpu_custom_call.1} parent=31 // pred_region
          %200 = dma.done [#allocation6], 48
        $region44: #{tpu_custom_call.1} parent=31 // pred_fallthru
          _
        %s201 = sand.u32 %s29, 1
        %s202 = scalar_lea.sflag [#allocation3], %s201
        %s203 = sand.u32 %s29, 1
        %s204 = smul.addr %s203, 8
        %s205 = scalar_lea.vmem [#allocation2], %s204
        %p206 = pneg %p42
        %p207 = pneg %p39
        %p208 = pneg %p63
        %p209 = pneg %p60
        %p210 = pneg %p84
        %p211 = pneg %p81
        %p212 = pneg %p110
        %p213 = pneg %p107
        %s214 = sand.u32 %s97, 1
        %s215 = scalar_lea.sflag [#allocation4], %s214
        %s216 = sand.u32 %s97, 1
        %s217 = smul.addr %s216, 8
        %s218 = scalar_lea.vmem [#allocation8], %s217
        %v219 = vld [vmem:[%s185] sm:$0xff]
        %v220 = vld [vmem:[#allocation5] sm:$0xff]
        %v221 = vld [vmem:[#allocation5 + $0x18] sm:$0xff]
        %v222 = vld [vmem:[#allocation5 + $0x30] sm:$0xff]
        %v223 = vld [vmem:[#allocation5 + $0x48] sm:$0xff]
        %v224 = vld [vmem:[#allocation7] sm:$0x1]
        %v226 = vperm.slane %v224, 0
        %vm228 = vcmask 261120
        %v230 = vsel %vm228, %v219, 0
        %232 = vmatpush.msra.mxu0 0.0
        %233 = vmatpush.msra.mxu0 0.0
        %234 = vmatpush.msra.mxu0 0.0
        %235 = vmatpush.msra.mxu0 0.0
        %236 = vmatpush.msra.mxu0 0.0
        %237 = vmatpush.msra.mxu0 0.0
        %238 = vmatpush.msra.mxu0 0.0
        %239 = vmatpush.msra.mxu0 0.0
        %240 = vmatpush.msra.mxu0 0.0
        %241 = vmatpush.msra.mxu0 0.0
        %242 = vmatpush.msra.mxu0 0.0
        %243 = vmatpush.msra.mxu0 0.0
        %244 = vmatpush.msra.mxu0 %v223
        %245 = vmatpush.msra.mxu0 %v222
        %246 = vmatpush.msra.mxu0 %v221
        %247 = vmatpush.msra.mxu0 %v220
        %248 = vmatmul.f32.gmra.mxu0 %v230
        %v249 = vpop.f32.mrf.mxu0
        %v250 = vadd.f32 %v226, %v249
        %251 = vdwg.mxu0
        %252 = vmax.xlane.f32.xlu0 %v250
        %v253 = vpop.xlane.xlu0 %252
        %v254 = vsub.f32 %v250, %v253
        %v255 = vmul.f32 %v254, 1.442695
        %v256 = vpow.pop %v255
        %257 = vadd.xlane.f32.xlu0 %v256
        %v258 = vpop.xlane.xlu0 %257
        %v259 = vrcp.pop %v258
        %v260 = vmul.f32 %v258, %v259
        %v261 = vsub.f32 1.0, %v260
        %v262 = vmul.f32 %v259, %v261
        %v263 = vadd.f32 %v259, %v262
        %vm264 = vweird.f32 %v258
        %vm265 = vweird.f32 %v259
        %vm266 = vmor %vm264, %vm265
        %v267 = vsel %vm266, %v259, %v263
        %v268 = vand.u32 2147483647, %v258
        %vm269 = vcmp.eq.f32.partialorder %v268, 8.507059e+37
        %v270 = vand.u32 %v258, 2147483648
        %v271 = vor.u32 1.1754944e-38, %v270
        %v272 = vsel %vm269, %v271, %v267
        %v273 = vmul.f32 %v256, %v272
        %v274 = vld [vmem:[#allocation5 + $0x8] sm:$0xff]
        %v275 = vld [vmem:[#allocation5 + $0x20] sm:$0xff]
        %v276 = vld [vmem:[#allocation5 + $0x38] sm:$0xff]
        %v277 = vld [vmem:[#allocation5 + $0x50] sm:$0xff]
        %v278 = vld [vmem:[#allocation7 + $0x1] sm:$0x1]
        %v280 = vperm.slane %v278, 0
        %282 = vmatpush.msra.mxu0 0.0
        %283 = vmatpush.msra.mxu0 0.0
        %284 = vmatpush.msra.mxu0 0.0
        %285 = vmatpush.msra.mxu0 0.0
        %286 = vmatpush.msra.mxu0 0.0
        %287 = vmatpush.msra.mxu0 0.0
        %288 = vmatpush.msra.mxu0 0.0
        %289 = vmatpush.msra.mxu0 0.0
        %290 = vmatpush.msra.mxu0 0.0
        %291 = vmatpush.msra.mxu0 0.0
        %292 = vmatpush.msra.mxu0 0.0
        %293 = vmatpush.msra.mxu0 0.0
        %294 = vmatpush.msra.mxu0 %v277
        %295 = vmatpush.msra.mxu0 %v276
        %296 = vmatpush.msra.mxu0 %v275
        %297 = vmatpush.msra.mxu0 %v274
        %298 = vmatmul.f32.gmra.mxu0 %v230
        %v299 = vpop.f32.mrf.mxu0
        %v300 = vadd.f32 %v280, %v299
        %301 = vdwg.mxu0
        %302 = vmax.xlane.f32.xlu0 %v300
        %v303 = vpop.xlane.xlu0 %302
        %v304 = vsub.f32 %v300, %v303
        %v305 = vmul.f32 %v304, 1.442695
        %v306 = vpow.pop %v305
        %307 = vadd.xlane.f32.xlu0 %v306
        %v308 = vpop.xlane.xlu0 %307
        %v309 = vrcp.pop %v308
        %v310 = vmul.f32 %v308, %v309
        %v311 = vsub.f32 1.0, %v310
        %v312 = vmul.f32 %v309, %v311
        %v313 = vadd.f32 %v309, %v312
        %vm314 = vweird.f32 %v308
        %vm315 = vweird.f32 %v309
        %vm316 = vmor %vm314, %vm315
        %v317 = vsel %vm316, %v309, %v313
        %v318 = vand.u32 2147483647, %v308
        %vm319 = vcmp.eq.f32.partialorder %v318, 8.507059e+37
        %v320 = vand.u32 %v308, 2147483648
        %v321 = vor.u32 1.1754944e-38, %v320
        %v322 = vsel %vm319, %v321, %v317
        %v323 = vmul.f32 %v306, %v322
        %v324 = vadd.f32 %v273, %v323
        %v325 = vld [vmem:[#allocation5 + $0x10] sm:$0xff]
        %v326 = vld [vmem:[#allocation5 + $0x28] sm:$0xff]
        %v327 = vld [vmem:[#allocation5 + $0x40] sm:$0xff]
        %v328 = vld [vmem:[#allocation5 + $0x58] sm:$0xff]
        %v329 = vld [vmem:[#allocation7 + $0x2] sm:$0x1]
        %v331 = vperm.slane %v329, 0
        %333 = vmatpush.msra.mxu0 0.0
        %334 = vmatpush.msra.mxu0 0.0
        %335 = vmatpush.msra.mxu0 0.0
        %336 = vmatpush.msra.mxu0 0.0
        %337 = vmatpush.msra.mxu0 0.0
        %338 = vmatpush.msra.mxu0 0.0
        %339 = vmatpush.msra.mxu0 0.0
        %340 = vmatpush.msra.mxu0 0.0
        %341 = vmatpush.msra.mxu0 0.0
        %342 = vmatpush.msra.mxu0 0.0
        %343 = vmatpush.msra.mxu0 0.0
        %344 = vmatpush.msra.mxu0 0.0
        %345 = vmatpush.msra.mxu0 %v328
        %346 = vmatpush.msra.mxu0 %v327
        %347 = vmatpush.msra.mxu0 %v326
        %348 = vmatpush.msra.mxu0 %v325
        %349 = vmatmul.f32.gmra.mxu0 %v230
        %v350 = vpop.f32.mrf.mxu0
        %v351 = vadd.f32 %v331, %v350
        %352 = vdwg.mxu0
        %353 = vmax.xlane.f32.xlu0 %v351
        %v354 = vpop.xlane.xlu0 %353
        %v355 = vsub.f32 %v351, %v354
        %v356 = vmul.f32 %v355, 1.442695
        %v357 = vpow.pop %v356
        %358 = vadd.xlane.f32.xlu0 %v357
        %v359 = vpop.xlane.xlu0 %358
        %v360 = vrcp.pop %v359
        %v361 = vmul.f32 %v359, %v360
        %v362 = vsub.f32 1.0, %v361
        %v363 = vmul.f32 %v360, %v362
        %v364 = vadd.f32 %v360, %v363
        %vm365 = vweird.f32 %v359
        %vm366 = vweird.f32 %v360
        %vm367 = vmor %vm365, %vm366
        %v368 = vsel %vm367, %v360, %v364
        %v369 = vand.u32 2147483647, %v359
        %vm370 = vcmp.eq.f32.partialorder %v369, 8.507059e+37
        %v371 = vand.u32 %v359, 2147483648
        %v372 = vor.u32 1.1754944e-38, %v371
        %v373 = vsel %vm370, %v372, %v368
        %v374 = vmul.f32 %v357, %v373
        %v375 = vadd.f32 %v324, %v374
        %v376 = vmul.f32 %v375, 0.33333334
        %v377 = vmax.f32 %v376, 1.1754944e-38
        %v378 = vlog2.pop %v377
        %v379 = vmul.f32 %v378, 0.6931472
        %380 = vst [vmem:[%s218] sm:$0xff] %v379
        %s381 = sand.u32 %s97, 1
        %s382 = scalar_lea.sflag [#allocation4], %s381
        %s383 = sand.u32 %s97, 1
        %s384 = smul.addr %s383, 8
        %s385 = scalar_lea.vmem [#allocation8], %s384
        // Predicated region
        $region45: #{tpu_custom_call.1} parent=31 // pred_check
          %p386 = pneg %p107
        $region46: #{tpu_custom_call.1} parent=31 // pred_check_branch
          %388 = sbr.rel (%p386) target = $region48
        $region47: #{tpu_custom_call.1} parent=31 // pred_region
          %390 = vsyncadd %s382, 0
          %s391 = smul.addr %s21, 8
          %s392 = scalar_lea.hbm %s3, %s391
          %s394 = sshll.u32 %s385, 4
          %s395 = int_to_ptr.vmem [resolvable:$true] %s394
          %s396 = sshll.u32 %s392, 4
          %s397 = int_to_ptr.hbm [resolvable:$true] %s396
          %399 = dma.vmem_to_hbm [thread:$0]  %s395, 128, %s397, %s382
        $region48: #{tpu_custom_call.1} parent=31 // pred_fallthru
          _
      $region32: #{tpu_custom_call.1} parent=5 // pred_fallthru
        _
      %p400 = scmp.le.s32.totalorder 2, %s16
      // Predicated region
      $region49: #{tpu_custom_call.1} parent=5 // pred_check
        %p401 = pneg %p400
      $region50: #{tpu_custom_call.1} parent=5 // pred_check_branch
        %403 = sbr.rel (%p401) target = $region52
      $region51: #{tpu_custom_call.1} parent=5 // pred_region
        %s404 = ssub.s32 %s16, 2
        // Predicated region
        $region53: #{tpu_custom_call.1} parent=51 // pred_check
          %p405 = pneg %p113
        $region54: #{tpu_custom_call.1} parent=51 // pred_check_branch
          %407 = sbr.rel (%p405) target = $region56
        $region55: #{tpu_custom_call.1} parent=51 // pred_region
          %s408 = sand.u32 %s98, 1
          %s409 = scalar_lea.sflag [#allocation4], %s408
          %s410 = sand.u32 %s98, 1
          %s411 = smul.addr %s410, 8
          %s412 = scalar_lea.vmem [#allocation8], %s411
          %414 = dma.done %s409, 128
        $region56: #{tpu_custom_call.1} parent=51 // pred_fallthru
          _
      $region52: #{tpu_custom_call.1} parent=5 // pred_fallthru
        _
    $region6: #{tpu_custom_call.1} parent=1 // loop_footer
      %s20 = sadd.s32 1, %s16
    $region7: #{tpu_custom_call.1} parent=1 // loop_footer_branch
      %15 = sbr.rel target = $region3
    $region8: #{tpu_custom_call.1} parent=1 // loop_exit
      _
    %415 = vsyncpa [#allocation3], 1
    %s416 = scalar_lea.sflag [#allocation3], 1
    %417 = vsyncpa %s416, 1
    %418 = vsyncpa [#allocation6], 1
    %419 = vsyncpa [#allocation4], 1
    %s420 = scalar_lea.sflag [#allocation4], 1
    %421 = vsyncpa %s420, 1

// kernel: tpu_custom_call.1
$region0: #{tpu_custom_call.1}
  #allocation0 [shape = 'u32[]', space=smem, size = 0x4, offset = 0x4, fixed_abs, tag = 'smem constant byte address 0x4 - core index']
  #allocation1 [shape = 'u32[72,128]{1,0:T(1,128)}', space=vmem, size = 0x9000, scoped, tag = 'internal scratch']
  %s0 = inlined_call_operand.hbm [shape: f32[16,32], index: 0, kind: input, shape index: {}]
  %s1 = inlined_call_operand.hbm [shape: f32[32,384], index: 1, kind: input, shape index: {}]
  %s2 = inlined_call_operand.hbm [shape: f32[1,384], index: 2, kind: input, shape index: {}]
  %s3 = inlined_call_operand.hbm [shape: f32[16,128], index: 3, kind: output, shape index: {}]
  %s4 = sld [smem:[#allocation0]]
  $region57: #{tpu_custom_call.1} parent=0
    _
  %s6 = ssub.s32 1, %s4
  %s7 = scalar_select 0, %s6, %s4
  $region1: #{tpu_custom_call.1} parent=0
    #allocation2 [shape = 'u8[8192]{0}', space=vmem, size = 0x2000, scoped, tag = 'input window, operand 0']
    #allocation3 [shape = 's32[2]{0}', space=sflag, size = 0x8, scoped, tag = 'scoped memory for tpu_custom_call.1']
    #allocation4 [shape = 's32[2]{0}', space=sflag, size = 0x8, scoped, tag = 'scoped memory for tpu_custom_call.1']
    #allocation5 [shape = 'u8[49152]{0}', space=vmem, size = 0xc000, scoped, tag = 'input window, operand 1, single buffered']
    #allocation6 [shape = 's32[1]{0}', space=sflag, size = 0x4, scoped, tag = 'scoped memory for tpu_custom_call.1']
    #allocation7 [shape = 'u8[1536]{0}', space=vmem, size = 0x800, scoped, tag = 'input window, operand 2, single buffered']
    #allocation8 [shape = 'u8[8192]{0}', space=vmem, size = 0x2000, scoped, tag = 'output window, operand 0']
    %8 = vsyncpa [#allocation3], 0
    %s9 = scalar_lea.sflag [#allocation3], 1
    %10 = vsyncpa %s9, 0
    %11 = vsyncpa [#allocation6], 0
    %12 = vsyncpa [#allocation4], 0
    %s13 = scalar_lea.sflag [#allocation4], 1
    %14 = vsyncpa %s13, 0
    loop: start=0, step=1, limit=4
    $region2: #{tpu_custom_call.1} parent=1 // loop_pre_header
      _
    $region3: #{tpu_custom_call.1} parent=1 // loop_header
      %s16 = sphi 0, %s20
      %p17 = scmp.ge.s32.totalorder %s16, 4
      %s26 = sphi 0, %s28
      %s29 = sphi 0, %s26
      %s30 = sphi 0, %s29
      %s46 = sphi 0, %s30
      %s50 = sphi 0, %s50
      %s52 = sphi 0, %s50
      %s53 = sphi 0, %s52
      %s67 = sphi 0, %s53
      %s71 = sphi 0, %s71
      %s73 = sphi 0, %s71
      %s74 = sphi 0, %s73
      %s88 = sphi 0, %s74
      %s94 = sphi 0, %s96
      %s97 = sphi 0, %s94
      %s98 = sphi 0, %s97
      %s114 = sphi 0, %s98
    $region4: #{tpu_custom_call.1} parent=1 // loop_header_branch
      %19 = sbr.rel (%p17) target = $region8
    $region5: #{tpu_custom_call.1} parent=1 // loop_body
      %s21 = ssub.s32 %s16, 1
      %s22 = ssub.s32 %s16, 2
      %s23 = sadd.s32 %s16, 1
      %s24 = ssub.s32 %s16, %s23
      %p25 = scmp.eq.s32.totalorder %s24, 0
      %s27 = sadd.s32 %s26, 1
      %s28 = scalar_select %p25, %s26, %s27
      %p31 = pneg %p25
      %p32 = scmp.eq.s32.totalorder %s16, 1
      %p33 = por %p31, %p32
      %p34 = scmp.ne.s32.totalorder %s26, %s29
      %p35 = scmp.eq.s32.totalorder %s16, 0
      %p36 = por %p34, %p35
      %p37 = scmp.ne.s32.totalorder %s26, %s29
      %p38 = scmp.eq.s32.totalorder %s21, 1
      %p39 = por %p37, %p38
      %p40 = scmp.ne.s32.totalorder %s29, %s30
      %p41 = scmp.eq.s32.totalorder %s21, 0
      %p42 = por %p40, %p41
      %p43 = scmp.ne.s32.totalorder %s29, %s30
      %p44 = scmp.eq.s32.totalorder %s22, 1
      %p45 = por %p43, %p44
      %p47 = scmp.ne.s32.totalorder %s30, %s46
      %p48 = scmp.eq.s32.totalorder %s22, 0
      %p49 = por %p47, %p48
      %s51 = sadd.s32 %s50, 1
      %p54 = scmp.eq.s32.totalorder %s16, 1
      %p55 = scmp.ne.s32.totalorder %s50, %s52
      %p56 = scmp.eq.s32.totalorder %s16, 0
      %p57 = por %p55, %p56
      %p58 = scmp.ne.s32.totalorder %s50, %s52
      %p59 = scmp.eq.s32.totalorder %s21, 1
      %p60 = por %p58, %p59
      %p61 = scmp.ne.s32.totalorder %s52, %s53
      %p62 = scmp.eq.s32.totalorder %s21, 0
      %p63 = por %p61, %p62
      %p64 = scmp.ne.s32.totalorder %s52, %s53
      %p65 = scmp.eq.s32.totalorder %s22, 1
      %p66 = por %p64, %p65
      %p68 = scmp.ne.s32.totalorder %s53, %s67
      %p69 = scmp.eq.s32.totalorder %s22, 0
      %p70 = por %p68, %p69
      %s72 = sadd.s32 %s71, 1
      %p75 = scmp.eq.s32.totalorder %s16, 1
      %p76 = scmp.ne.s32.totalorder %s71, %s73
      %p77 = scmp.eq.s32.totalorder %s16, 0
      %p78 = por %p76, %p77
      %p79 = scmp.ne.s32.totalorder %s71, %s73
      %p80 = scmp.eq.s32.totalorder %s21, 1
      %p81 = por %p79, %p80
      %p82 = scmp.ne.s32.totalorder %s73, %s74
      %p83 = scmp.eq.s32.totalorder %s21, 0
      %p84 = por %p82, %p83
      %p85 = scmp.ne.s32.totalorder %s73, %s74
      %p86 = scmp.eq.s32.totalorder %s22, 1
      %p87 = por %p85, %p86
      %p89 = scmp.ne.s32.totalorder %s74, %s88
      %p90 = scmp.eq.s32.totalorder %s22, 0
      %p91 = por %p89, %p90
      %s92 = ssub.s32 %s16, %s23
      %p93 = scmp.eq.s32.totalorder %s92, 0
      %s95 = sadd.s32 %s94, 1
      %s96 = scalar_select %p93, %s94, %s95
      %p99 = pneg %p93
      %p100 = scmp.eq.s32.totalorder %s16, 1
      %p101 = por %p99, %p100
      %p102 = scmp.ne.s32.totalorder %s94, %s97
      %p103 = scmp.eq.s32.totalorder %s16, 0
      %p104 = por %p102, %p103
      %p105 = scmp.ne.s32.totalorder %s94, %s97
      %p106 = scmp.eq.s32.totalorder %s21, 1
      %p107 = por %p105, %p106
      %p108 = scmp.ne.s32.totalorder %s97, %s98
      %p109 = scmp.eq.s32.totalorder %s21, 0
      %p110 = por %p108, %p109
      %p111 = scmp.ne.s32.totalorder %s97, %s98
      %p112 = scmp.eq.s32.totalorder %s22, 1
      %p113 = por %p111, %p112
      %p115 = scmp.ne.s32.totalorder %s98, %s114
      %p116 = scmp.eq.s32.totalorder %s22, 0
      %p117 = por %p115, %p116
      %p118 = scmp.le.s32.totalorder 1, %s16
      %p119 = scmp.lt.s32.totalorder %s16, 3
      %p120 = pnand %p118, %p119
      %p121 = pneg %p120
      // Predicated region
      $region9: #{tpu_custom_call.1} parent=5 // pred_check
        _
      $region10: #{tpu_custom_call.1} parent=5 // pred_check_branch
        %123 = sbr.rel (%p120) target = $region12
      $region11: #{tpu_custom_call.1} parent=5 // pred_region
        %s124 = ssub.s32 %s16, 1
        // Predicated region
        $region13: #{tpu_custom_call.1} parent=11 // pred_check
          %p125 = pneg %p63
        $region14: #{tpu_custom_call.1} parent=11 // pred_check_branch
          %127 = sbr.rel (%p125) target = $region16
        $region15: #{tpu_custom_call.1} parent=11 // pred_region
          %129 = vsyncadd [#allocation6], 0
          %s130 = sshll.u32 %s1, 4
          %s131 = int_to_ptr.hbm [resolvable:$true] %s130
          %s132 = sshll.u32 [#allocation5], 4
          %s133 = int_to_ptr.vmem [resolvable:$true] %s132
          %138 = dma.hbm_to_vmem [thread:$0]  %s131, 1536, %s133, [#allocation6], 384, 384, 24
        $region16: #{tpu_custom_call.1} parent=11 // pred_fallthru
          _
        // Predicated region
        $region17: #{tpu_custom_call.1} parent=11 // pred_check
          %p139 = pneg %p84
        $region18: #{tpu_custom_call.1} parent=11 // pred_check_branch
          %141 = sbr.rel (%p139) target = $region20
        $region19: #{tpu_custom_call.1} parent=11 // pred_region
          %143 = vsyncadd [#allocation6], 0
          %s145 = sshll.u32 %s2, 4
          %s146 = int_to_ptr.hbm [resolvable:$true] %s145
          %s147 = sshll.u32 [#allocation7], 4
          %s148 = int_to_ptr.vmem [resolvable:$true] %s147
          %150 = dma.hbm_to_vmem [thread:$0]  %s146, 48, %s148, [#allocation6]
        $region20: #{tpu_custom_call.1} parent=11 // pred_fallthru
          _
      $region12: #{tpu_custom_call.1} parent=5 // pred_fallthru
        _
      %p151 = scmp.lt.s32.totalorder %s16, 2
      // Predicated region
      $region21: #{tpu_custom_call.1} parent=5 // pred_check
        %p152 = pneg %p151
      $region22: #{tpu_custom_call.1} parent=5 // pred_check_branch
        %154 = sbr.rel (%p152) target = $region24
      $region23: #{tpu_custom_call.1} parent=5 // pred_region
        // Predicated region
        $region25: #{tpu_custom_call.1} parent=23 // pred_check
          %p155 = pneg %p36
        $region26: #{tpu_custom_call.1} parent=23 // pred_check_branch
          %157 = sbr.rel (%p155) target = $region28
        $region27: #{tpu_custom_call.1} parent=23 // pred_region
          %s158 = sand.u32 %s26, 1
          %s159 = scalar_lea.sflag [#allocation3], %s158
          %s160 = sand.u32 %s26, 1
          %s161 = smul.addr %s160, 8
          %s162 = scalar_lea.vmem [#allocation2], %s161
          %164 = vsyncadd %s159, 0
          %s165 = smul.addr %s16, 8
          %s166 = scalar_lea.hbm %s0, %s165
          %s168 = sshll.u32 %s166, 4
          %s169 = int_to_ptr.hbm [resolvable:$true] %s168
          %s170 = sshll.u32 %s162, 4
          %s171 = int_to_ptr.vmem [resolvable:$true] %s170
          %173 = dma.hbm_to_vmem [thread:$0]  %s169, 128, %s171, %s159
        $region28: #{tpu_custom_call.1} parent=23 // pred_fallthru
          _
      $region24: #{tpu_custom_call.1} parent=5 // pred_fallthru
        _
      %p174 = scmp.le.s32.totalorder 1, %s16
      %p175 = scmp.lt.s32.totalorder %s16, 3
      %p176 = pnand %p174, %p175
      %p177 = pneg %p176
      // Predicated region
      $region29: #{tpu_custom_call.1} parent=5 // pred_check
        _
      $region30: #{tpu_custom_call.1} parent=5 // pred_check_branch
        %179 = sbr.rel (%p176) target = $region32
      $region31: #{tpu_custom_call.1} parent=5 // pred_region
        %s180 = ssub.s32 %s16, 1
        %s181 = sand.u32 %s29, 1
        %s182 = scalar_lea.sflag [#allocation3], %s181
        %s183 = sand.u32 %s29, 1
        %s184 = smul.addr %s183, 8
        %s185 = scalar_lea.vmem [#allocation2], %s184
        // Predicated region
        $region33: #{tpu_custom_call.1} parent=31 // pred_check
          %p186 = pneg %p42
        $region34: #{tpu_custom_call.1} parent=31 // pred_check_branch
          %188 = sbr.rel (%p186) target = $region36
        $region35: #{tpu_custom_call.1} parent=31 // pred_region
          %190 = dma.done %s182, 128
        $region36: #{tpu_custom_call.1} parent=31 // pred_fallthru
          _
        // Predicated region
        $region37: #{tpu_custom_call.1} parent=31 // pred_check
          %p191 = pneg %p63
        $region38: #{tpu_custom_call.1} parent=31 // pred_check_branch
          %193 = sbr.rel (%p191) target = $region40
        $region39: #{tpu_custom_call.1} parent=31 // pred_region
          %195 = dma.done [#allocation6], 1536
        $region40: #{tpu_custom_call.1} parent=31 // pred_fallthru
          _
        // Predicated region
        $region41: #{tpu_custom_call.1} parent=31 // pred_check
          %p196 = pneg %p84
        $region42: #{tpu_custom_call.1} parent=31 // pred_check_branch
          %198 = sbr.rel (%p196) target = $region44
        $region43: #{tpu_custom_call.1} parent=31 // pred_region
          %200 = dma.done [#allocation6], 48
        $region44: #{tpu_custom_call.1} parent=31 // pred_fallthru
          _
        %s201 = sand.u32 %s29, 1
        %s202 = scalar_lea.sflag [#allocation3], %s201
        %s203 = sand.u32 %s29, 1
        %s204 = smul.addr %s203, 8
        %s205 = scalar_lea.vmem [#allocation2], %s204
        %p206 = pneg %p42
        %p207 = pneg %p39
        %p208 = pneg %p63
        %p209 = pneg %p60
        %p210 = pneg %p84
        %p211 = pneg %p81
        %p212 = pneg %p110
        %p213 = pneg %p107
        %s214 = sand.u32 %s97, 1
        %s215 = scalar_lea.sflag [#allocation4], %s214
        %s216 = sand.u32 %s97, 1
        %s217 = smul.addr %s216, 8
        %s218 = scalar_lea.vmem [#allocation8], %s217
        %v219 = vld [vmem:[%s185] sm:$0xff]
        %v220 = vld [vmem:[#allocation5] sm:$0xff]
        %v221 = vld [vmem:[#allocation5 + $0x18] sm:$0xff]
        %v222 = vld [vmem:[#allocation5 + $0x30] sm:$0xff]
        %v223 = vld [vmem:[#allocation5 + $0x48] sm:$0xff]
        %v224 = vld [vmem:[#allocation7] sm:$0x1]
        %v226 = vperm.slane %v224, 0
        %vm228 = vcmask 261120
        %v230 = vsel %vm228, %v219, 0
        %232 = vmatpush.msra.mxu0 0.0
        %233 = vmatpush.msra.mxu0 0.0
        %234 = vmatpush.msra.mxu0 0.0
        %235 = vmatpush.msra.mxu0 0.0
        %236 = vmatpush.msra.mxu0 0.0
        %237 = vmatpush.msra.mxu0 0.0
        %238 = vmatpush.msra.mxu0 0.0
        %239 = vmatpush.msra.mxu0 0.0
        %240 = vmatpush.msra.mxu0 0.0
        %241 = vmatpush.msra.mxu0 0.0
        %242 = vmatpush.msra.mxu0 0.0
        %243 = vmatpush.msra.mxu0 0.0
        %244 = vmatpush.msra.mxu0 %v223
        %245 = vmatpush.msra.mxu0 %v222
        %246 = vmatpush.msra.mxu0 %v221
        %247 = vmatpush.msra.mxu0 %v220
        %248 = vmatmul.f32.gmra.mxu0 %v230
        %v249 = vpop.f32.mrf.mxu0
        %v250 = vadd.f32 %v226, %v249
        %251 = vdwg.mxu0
        %252 = vmax.xlane.f32.xlu0 %v250
        %v253 = vpop.xlane.xlu0 %252
        %v254 = vsub.f32 %v250, %v253
        %v255 = vmul.f32 %v254, 1.442695
        %v256 = vpow.pop %v255
        %257 = vadd.xlane.f32.xlu0 %v256
        %v258 = vpop.xlane.xlu0 %257
        %v259 = vrcp.pop %v258
        %v260 = vmul.f32 %v258, %v259
        %v261 = vsub.f32 1.0, %v260
        %v262 = vmul.f32 %v259, %v261
        %v263 = vadd.f32 %v259, %v262
        %vm264 = vweird.f32 %v258
        %vm265 = vweird.f32 %v259
        %vm266 = vmor %vm264, %vm265
        %v267 = vsel %vm266, %v259, %v263
        %v268 = vand.u32 2147483647, %v258
        %vm269 = vcmp.eq.f32.partialorder %v268, 8.507059e+37
        %v270 = vand.u32 %v258, 2147483648
        %v271 = vor.u32 1.1754944e-38, %v270
        %v272 = vsel %vm269, %v271, %v267
        %v273 = vmul.f32 %v256, %v272
        %v274 = vld [vmem:[#allocation5 + $0x8] sm:$0xff]
        %v275 = vld [vmem:[#allocation5 + $0x20] sm:$0xff]
        %v276 = vld [vmem:[#allocation5 + $0x38] sm:$0xff]
        %v277 = vld [vmem:[#allocation5 + $0x50] sm:$0xff]
        %v278 = vld [vmem:[#allocation7 + $0x1] sm:$0x1]
        %v280 = vperm.slane %v278, 0
        %282 = vmatpush.msra.mxu0 0.0
        %283 = vmatpush.msra.mxu0 0.0
        %284 = vmatpush.msra.mxu0 0.0
        %285 = vmatpush.msra.mxu0 0.0
        %286 = vmatpush.msra.mxu0 0.0
        %287 = vmatpush.msra.mxu0 0.0
        %288 = vmatpush.msra.mxu0 0.0
        %289 = vmatpush.msra.mxu0 0.0
        %290 = vmatpush.msra.mxu0 0.0
        %291 = vmatpush.msra.mxu0 0.0
        %292 = vmatpush.msra.mxu0 0.0
        %293 = vmatpush.msra.mxu0 0.0
        %294 = vmatpush.msra.mxu0 %v277
        %295 = vmatpush.msra.mxu0 %v276
        %296 = vmatpush.msra.mxu0 %v275
        %297 = vmatpush.msra.mxu0 %v274
        %298 = vmatmul.f32.gmra.mxu0 %v230
        %v299 = vpop.f32.mrf.mxu0
        %v300 = vadd.f32 %v280, %v299
        %301 = vdwg.mxu0
        %302 = vmax.xlane.f32.xlu0 %v300
        %v303 = vpop.xlane.xlu0 %302
        %v304 = vsub.f32 %v300, %v303
        %v305 = vmul.f32 %v304, 1.442695
        %v306 = vpow.pop %v305
        %307 = vadd.xlane.f32.xlu0 %v306
        %v308 = vpop.xlane.xlu0 %307
        %v309 = vrcp.pop %v308
        %v310 = vmul.f32 %v308, %v309
        %v311 = vsub.f32 1.0, %v310
        %v312 = vmul.f32 %v309, %v311
        %v313 = vadd.f32 %v309, %v312
        %vm314 = vweird.f32 %v308
        %vm315 = vweird.f32 %v309
        %vm316 = vmor %vm314, %vm315
        %v317 = vsel %vm316, %v309, %v313
        %v318 = vand.u32 2147483647, %v308
        %vm319 = vcmp.eq.f32.partialorder %v318, 8.507059e+37
        %v320 = vand.u32 %v308, 2147483648
        %v321 = vor.u32 1.1754944e-38, %v320
        %v322 = vsel %vm319, %v321, %v317
        %v323 = vmul.f32 %v306, %v322
        %v324 = vadd.f32 %v273, %v323
        %v325 = vld [vmem:[#allocation5 + $0x10] sm:$0xff]
        %v326 = vld [vmem:[#allocation5 + $0x28] sm:$0xff]
        %v327 = vld [vmem:[#allocation5 + $0x40] sm:$0xff]
        %v328 = vld [vmem:[#allocation5 + $0x58] sm:$0xff]
        %v329 = vld [vmem:[#allocation7 + $0x2] sm:$0x1]
        %v331 = vperm.slane %v329, 0
        %333 = vmatpush.msra.mxu0 0.0
        %334 = vmatpush.msra.mxu0 0.0
        %335 = vmatpush.msra.mxu0 0.0
        %336 = vmatpush.msra.mxu0 0.0
        %337 = vmatpush.msra.mxu0 0.0
        %338 = vmatpush.msra.mxu0 0.0
        %339 = vmatpush.msra.mxu0 0.0
        %340 = vmatpush.msra.mxu0 0.0
        %341 = vmatpush.msra.mxu0 0.0
        %342 = vmatpush.msra.mxu0 0.0
        %343 = vmatpush.msra.mxu0 0.0
        %344 = vmatpush.msra.mxu0 0.0
        %345 = vmatpush.msra.mxu0 %v328
        %346 = vmatpush.msra.mxu0 %v327
        %347 = vmatpush.msra.mxu0 %v326
        %348 = vmatpush.msra.mxu0 %v325
        %349 = vmatmul.f32.gmra.mxu0 %v230
        %v350 = vpop.f32.mrf.mxu0
        %v351 = vadd.f32 %v331, %v350
        %352 = vdwg.mxu0
        %353 = vmax.xlane.f32.xlu0 %v351
        %v354 = vpop.xlane.xlu0 %353
        %v355 = vsub.f32 %v351, %v354
        %v356 = vmul.f32 %v355, 1.442695
        %v357 = vpow.pop %v356
        %358 = vadd.xlane.f32.xlu0 %v357
        %v359 = vpop.xlane.xlu0 %358
        %v360 = vrcp.pop %v359
        %v361 = vmul.f32 %v359, %v360
        %v362 = vsub.f32 1.0, %v361
        %v363 = vmul.f32 %v360, %v362
        %v364 = vadd.f32 %v360, %v363
        %vm365 = vweird.f32 %v359
        %vm366 = vweird.f32 %v360
        %vm367 = vmor %vm365, %vm366
        %v368 = vsel %vm367, %v360, %v364
        %v369 = vand.u32 2147483647, %v359
        %vm370 = vcmp.eq.f32.partialorder %v369, 8.507059e+37
        %v371 = vand.u32 %v359, 2147483648
        %v372 = vor.u32 1.1754944e-38, %v371
        %v373 = vsel %vm370, %v372, %v368
        %v374 = vmul.f32 %v357, %v373
        %v375 = vadd.f32 %v324, %v374
        %v376 = vmul.f32 %v375, 0.33333334
        %v377 = vmax.f32 %v376, 1.1754944e-38
        %v378 = vlog2.pop %v377
        %v379 = vmul.f32 %v378, 0.6931472
        %380 = vst [vmem:[%s218] sm:$0xff] %v379
        %s381 = sand.u32 %s97, 1
        %s382 = scalar_lea.sflag [#allocation4], %s381
        %s383 = sand.u32 %s97, 1
        %s384 = smul.addr %s383, 8
        %s385 = scalar_lea.vmem [#allocation8], %s384
        // Predicated region
        $region45: #{tpu_custom_call.1} parent=31 // pred_check
          %p386 = pneg %p107
        $region46: #{tpu_custom_call.1} parent=31 // pred_check_branch
          %388 = sbr.rel (%p386) target = $region48
        $region47: #{tpu_custom_call.1} parent=31 // pred_region
          %390 = vsyncadd %s382, 0
          %s391 = smul.addr %s21, 8
          %s392 = scalar_lea.hbm %s3, %s391
          %s394 = sshll.u32 %s385, 4
          %s395 = int_to_ptr.vmem [resolvable:$true] %s394
          %s396 = sshll.u32 %s392, 4
          %s397 = int_to_ptr.hbm [resolvable:$true] %s396
          %399 = dma.vmem_to_hbm [thread:$0]  %s395, 128, %s397, %s382
        $region48: #{tpu_custom_call.1} parent=31 // pred_fallthru
          _
      $region32: #{tpu_custom_call.1} parent=5 // pred_fallthru
        _
      %p400 = scmp.le.s32.totalorder 2, %s16
      // Predicated region
      $region49: #{tpu_custom_call.1} parent=5 // pred_check
        %p401 = pneg %p400
      $region50: #{tpu_custom_call.1} parent=5 // pred_check_branch
        %403 = sbr.rel (%p401) target = $region52
      $region51: #{tpu_custom_call.1} parent=5 // pred_region
        %s404 = ssub.s32 %s16, 2
        // Predicated region
        $region53: #{tpu_custom_call.1} parent=51 // pred_check
          %p405 = pneg %p113
        $region54: #{tpu_custom_call.1} parent=51 // pred_check_branch
          %407 = sbr.rel (%p405) target = $region56
        $region55: #{tpu_custom_call.1} parent=51 // pred_region
          %s408 = sand.u32 %s98, 1
          %s409 = scalar_lea.sflag [#allocation4], %s408
          %s410 = sand.u32 %s98, 1
          %s411 = smul.addr %s410, 8
          %s412 = scalar_lea.vmem [#allocation8], %s411
          %414 = dma.done %s409, 128
        $region56: #{tpu_custom_call.1} parent=51 // pred_fallthru
          _
      $region52: #{tpu_custom_call.1} parent=5 // pred_fallthru
        _
    $region6: #{tpu_custom_call.1} parent=1 // loop_footer
      %s20 = sadd.s32 1, %s16
    $region7: #{tpu_custom_call.1} parent=1 // loop_footer_branch
      %15 = sbr.rel target = $region3
    $region8: #{tpu_custom_call.1} parent=1 // loop_exit
      _
    %415 = vsyncpa [#allocation3], 1
    %s416 = scalar_lea.sflag [#allocation3], 1
    %417 = vsyncpa %s416, 1
    %418 = vsyncpa [#allocation6], 1
    %419 = vsyncpa [#allocation4], 1
    %s420 = scalar_lea.sflag [#allocation4], 1
    %421 = vsyncpa %s420, 1

</llo_original>
